<compile_context>
chip_gen: v7x
topology: tpu7x:2x2x1
jax: 0.10.0
libtpu: 0.0.40
codegen_flags: <defaults>
</compile_context>

<pallas_src>
import functools

import jax
import jax.numpy as jnp
from jax.experimental import pallas as pl
from jax.experimental.pallas import tpu as pltpu


# ----------------------------------------------------------------------------
# Fused C3 kernel
# ----------------------------------------------------------------------------
def _silu(y):
    # SiLU = y * sigmoid(y) = 0.5 * y * (1 + tanh(y/2)): single EUP op, no inf.
    return 0.5 * y * (1.0 + jnp.tanh(0.5 * y))


def _c3_fused_kernel(x_ref,                               # (WIN, C1) bf16 window
                     w12_ref, b12_ref,                    # fused cv1|cv2 (1x1)
                     w3a_ref, w3b_ref, b3_ref,            # cv3 (1x1, split weights)
                     mw1_ref, mb1_ref,                    # bottleneck cv1 (1x1), stacked
                     mw2_ref, mb2_ref,                    # bottleneck cv2 (k=3 im2col), stacked
                     o_ref,
                     *, L, TL, WIN, HP, n, c_, shortcut):
    f32 = jnp.float32
    bf16 = jnp.bfloat16
    l = pl.program_id(1)

    # Validity mask of window rows vs. the true sequence [0, L).  Zeroing the
    # intermediate activation t at invalid rows (a) reproduces the k=3 conv's
    # zero padding exactly at the true sequence boundaries and (b) confines the
    # window-edge halo corruption to the HP >= n halo rows.
    row = jax.lax.broadcasted_iota(jnp.int32, (WIN, 1), 0)
    g = l * TL - HP + row                                 # global position of each row
    mask = jnp.logical_and(g >= 0, g < L).astype(f32)     # (WIN, 1)

    # ---- fused cv1 + cv2 on the haloed window (single MXU call) -------------
    xw = x_ref[...]                                       # (WIN, C1) bf16
    y12 = _silu(jnp.dot(xw, w12_ref[...], preferred_element_type=f32)
                + b12_ref[...])                           # (WIN, 2c_) f32
    y1 = y12[:, :c_]                                      # cv1 branch, full window
    y2 = y12[HP:HP + TL, c_:].astype(bf16)                # cv2 branch, output rows only

    # ---- bottleneck chain ----------------------------------------------------
    for i in range(n):                                    # static unroll
        t = _silu(jnp.dot(y1.astype(bf16), mw1_ref[i],
                          preferred_element_type=f32) + mb1_ref[i])   # (WIN, c_)
        t = t * mask                                      # zero invalid / boundary rows
        # k=3 / pad=1 conv: tap shifts via XLU rolls, one deep im2col matmul.
        t_up = pltpu.roll(t, 1, axis=0)                   # row j holds t[j-1]
        t_dn = pltpu.roll(t, WIN - 1, axis=0)             # row j holds t[j+1]
        z = jnp.concatenate([t_up, t, t_dn], axis=-1).astype(bf16)    # (WIN, 3c_)
        y = _silu(jnp.dot(z, mw2_ref[i], preferred_element_type=f32)
                  + mb2_ref[i])                           # (WIN, c_)
        y1 = (y1 + y) if shortcut else y

    # ---- fused concat + cv3 (split weights, static 8-aligned slices) --------
    y1o = y1[HP:HP + TL, :].astype(bf16)                  # (TL, c_)
    y3 = (jnp.dot(y1o, w3a_ref[...], preferred_element_type=f32)
          + jnp.dot(y2, w3b_ref[...], preferred_element_type=f32))
    o_ref[...] = _silu(y3 + b3_ref[...]).astype(o_ref.dtype)


# ----------------------------------------------------------------------------
# Wrapper
# ----------------------------------------------------------------------------
def _pick_tl(L, target):
    """Largest length-tile that divides L, is a multiple of 8 and <= target."""
    if L <= target:
        return L
    best = None
    t = 8
    while t <= target:
        if L % t == 0:
            best = t
        t += 8
    return best if best is not None else L


def c3_forward(x_ncl, params, n, *, shortcut=True, tl_target=512,
               vmem_limit_bytes=None):
    """C3 forward pass.  x_ncl: (B, C1, L) float32 (PyTorch NCL layout)."""
    B, C1, L = x_ncl.shape
    x = jnp.transpose(x_ncl, (0, 2, 1))                   # (B, L, C1): channels -> lanes
    w12, b12 = params["cv12"]
    w3a, w3b, b3 = params["cv3"]
    mw1, mb1, mw2, mb2 = params["m"]
    c_ = w3a.shape[0]
    C2 = w3a.shape[-1]

    # Halo rounded up to a sublane multiple so the in-kernel offset is static
    # and 8-aligned; one extra halo row per k=3 conv is required (HP >= n).
    HP = 0 if n == 0 else -(-n // 8) * 8
    TL = _pick_tl(L, tl_target)
    nL = L // TL
    assert TL * nL == L
    WIN = TL + 2 * HP

    # One-time HBM pass: pad + extract overlapping windows + cast to bf16.
    xp = jnp.pad(x, ((0, 0), (HP, HP), (0, 0)))           # (B, L + 2*HP, C1)
    idx = jnp.arange(nL)[:, None] * TL + jnp.arange(WIN)[None, :]
    xw = xp[:, idx, :].astype(jnp.bfloat16)               # (B, nL, WIN, C1)

    kern = functools.partial(_c3_fused_kernel, L=L, TL=TL, WIN=WIN, HP=HP,
                             n=n, c_=c_, shortcut=shortcut)

    def _full(a):                                         # whole array, VMEM resident
        zeros = (0,) * a.ndim
        return pl.BlockSpec(a.shape, lambda b, l, _z=zeros: _z)

    if vmem_limit_bytes is None:
        nbytes = lambda a: a.size * a.dtype.itemsize
        w_bytes = sum(nbytes(a) for a in (w12, b12, w3a, w3b, b3,
                                          mw1, mb1, mw2, mb2))
        x_blk = WIN * C1 * 2
        o_blk = TL * C2 * 4
        act = WIN * (6 * c_) * 4                          # live f32 intermediates (rough)
        need = 2 * w_bytes + 2 * (x_blk + o_blk) + 4 * act
        vmem_limit_bytes = int(min(max(32 << 20, 2 * need), 100 << 20))

    out = pl.pallas_call(
        kern,
        out_shape=jax.ShapeDtypeStruct((B, L, C2), jnp.float32),
        grid=(B, nL),
        in_specs=[pl.BlockSpec((None, None, WIN, C1), lambda b, l: (b, l, 0, 0)),
                  _full(w12), _full(b12),
                  _full(w3a), _full(w3b), _full(b3),
                  _full(mw1), _full(mb1),
                  _full(mw2), _full(mb2)],
        out_specs=pl.BlockSpec((None, TL, C2), lambda b, l: (b, l, 0)),
        compiler_params=pltpu.CompilerParams(
            dimension_semantics=("parallel", "parallel"),
            vmem_limit_bytes=vmem_limit_bytes),
    )(xw, w12, b12, w3a, w3b, b3, mw1, mb1, mw2, mb2)
    return jnp.transpose(out, (0, 2, 1))                  # back to (B, C2, L)


# ----------------------------------------------------------------------------
# Parameters (deterministic; BN folded: scale -> weights, rest -> bias)
# ----------------------------------------------------------------------------
def make_cna_params(key, cin, cout, k):
    kw, kb, kg, kbt, km, kv = jax.random.split(key, 6)
    w = jax.random.normal(kw, (cout, cin, k), jnp.float32) * 0.1      # Conv1d weight
    cb = jax.random.normal(kb, (cout,), jnp.float32) * 0.1            # Conv1d bias
    gamma = 1.0 + 0.1 * jax.random.normal(kg, (cout,), jnp.float32)
    beta = 0.1 * jax.random.normal(kbt, (cout,), jnp.float32)
    mean = 0.1 * jax.random.normal(km, (cout,), jnp.float32)
    var = 0.9 + 0.1 * jnp.abs(jax.random.normal(kv, (cout,), jnp.float32))
    scale = gamma / jnp.sqrt(var + 1e-5)
    bias = beta + (cb - mean) * scale
    # (k*cin, cout), taps-major: rows [d*cin:(d+1)*cin) apply to input offset d-1.
    W = jnp.transpose(w, (2, 1, 0)).reshape(k * cin, cout)
    W = W * scale[None, :]                                # fold BN scale into weights
    return W, bias.reshape(1, -1)


def build_c3_params(key, c1, c2, n, e=0.5):
    c_ = int(c2 * e)
    keys = jax.random.split(key, 3 + 2 * n)
    w1, b1 = make_cna_params(keys[0], c1, c_, 1)
    w2, b2 = make_cna_params(keys[1], c1, c_, 1)
    w3, b3 = make_cna_params(keys[2], 2 * c_, c2, 1)
    m1 = [make_cna_params(keys[3 + 2 * i], c_, c_, 1) for i in range(n)]
    m2 = [make_cna_params(keys[4 + 2 * i], c_, c_, 3) for i in range(n)]
    bf = lambda a: a.astype(jnp.bfloat16)
    return {
        # cv1 and cv2 fused: [w1 | w2] along output channels.
        "cv12": (bf(jnp.concatenate([w1, w2], axis=1)),
                 jnp.concatenate([b1, b2], axis=1)),
        # cv3 split for fused concat+cv3 (top half multiplies y1, bottom y2).
        "cv3": (bf(w3[:c_]), bf(w3[c_:]), b3),
        "m": (bf(jnp.stack([p[0] for p in m1])), jnp.stack([p[1] for p in m1]),
              bf(jnp.stack([p[0] for p in m2])), jnp.stack([p[1] for p in m2])),
    }


# ----------------------------------------------------------------------------
# Pure-JAX reference (same math, same bf16 matmul inputs) for validation
# ----------------------------------------------------------------------------
def _silu_ref(y):
    return y * jax.nn.sigmoid(y)


def c3_reference(x_ncl, params, n, shortcut=True):
    x = jnp.transpose(x_ncl, (0, 2, 1))
    w12, b12 = params["cv12"]
    w3a, w3b, b3 = params["cv3"]
    mw1, mb1, mw2, mb2 = params["m"]
    c_ = w3a.shape[0]
    L = x.shape[1]
    bf16 = jnp.bfloat16

    def mm(a, w):
        return jnp.einsum("blc,cd->bld", a.astype(bf16), w,
                          preferred_element_type=jnp.float32)

    y12 = _silu_ref(mm(x, w12) + b12)
    y1, y2 = y12[..., :c_], y12[..., c_:]
    for i in range(n):
        t = _silu_ref(mm(y1, mw1[i]) + mb1[i])
        tp = jnp.pad(t, ((0, 0), (1, 1), (0, 0)))         # k=3, p=1 conv
        y = sum(mm(tp[:, d:d + L], mw2[i, d * c_:(d + 1) * c_]) for d in range(3))
        y = _silu_ref(y + mb2[i])
        y1 = (y1 + y) if shortcut else y
    out = _silu_ref(mm(y1, w3a) + mm(y2, w3b) + b3)
    return jnp.transpose(out, (0, 2, 1))


# ----------------------------------------------------------------------------
if __name__ == "__main__":
    test_cases = [
        # (B, C1, C2, L, n, tl_target, shortcut)
        (2, 4, 8, 16, 2, 128, True),     # small spec-like shape, single L tile
        (2, 4, 8, 16, 2, 128, False),    # no-shortcut bottleneck path
        (2, 8, 16, 512, 2, 128, True),   # multi-tile halo / roll-wraparound path
        (2, 8, 16, 256, 9, 64, True),    # deep bottleneck chain, HP = 16 halo
    ]
    for (B, C1, C2, L, n, tl_target, shortcut) in test_cases:
        kx, kp = jax.random.split(jax.random.PRNGKey(0))
        x = jax.random.normal(kx, (B, C1, L), jnp.float32)
        params = build_c3_params(kp, C1, C2, n)
        out = jax.block_until_ready(
            c3_forward(x, params, n, shortcut=shortcut, tl_target=tl_target))
        ref = c3_reference(x, params, n, shortcut=shortcut)
        assert out.shape == (B, C2, L), (out.shape, (B, C2, L))
        err = float(jnp.max(jnp.abs(out - ref)))
        assert err < 1e-2, (
            f"mismatch vs reference for {(B, C1, C2, L, n, shortcut)}: max|diff|={err}")
    print("KERNEL_OK")
</pallas_src>

<mosaic_0001>
module attributes {stable_mosaic.version = 11 : i64} {
  func.func @_c3_fused_kernel(%arg0: i32, %arg1: i32, %arg2: memref<1x1x32x4xbf16, #tpu.memory_space<vmem>>, %arg3: memref<4x8xbf16, #tpu.memory_space<vmem>>, %arg4: memref<1x8xf32, #tpu.memory_space<vmem>>, %arg5: memref<4x8xbf16, #tpu.memory_space<vmem>>, %arg6: memref<4x8xbf16, #tpu.memory_space<vmem>>, %arg7: memref<1x8xf32, #tpu.memory_space<vmem>>, %arg8: memref<2x4x4xbf16, #tpu.memory_space<vmem>>, %arg9: memref<2x1x4xf32, #tpu.memory_space<vmem>>, %arg10: memref<2x12x4xbf16, #tpu.memory_space<vmem>>, %arg11: memref<2x1x4xf32, #tpu.memory_space<vmem>>, %arg12: memref<1x16x8xf32, #tpu.memory_space<vmem>>) attributes {dimension_semantics = [#tpu.dimension_semantics<parallel>, #tpu.dimension_semantics<parallel>], iteration_bounds = array<i64: 2, 1>, scalar_prefetch = 0 : i64, scratch_operands = 0 : i64, tpu.core_type = #tpu.core_type<tc>, window_params = [{transform_indices = @transform_0, window_bounds = array<i64: 1, 1, 32, 4>}, {pipeline_mode = #tpu.pipeline_mode<synchronous>, transform_indices = @transform_1, window_bounds = array<i64: 4, 8>}, {pipeline_mode = #tpu.pipeline_mode<synchronous>, transform_indices = @transform_2, window_bounds = array<i64: 1, 8>}, {pipeline_mode = #tpu.pipeline_mode<synchronous>, transform_indices = @transform_3, window_bounds = array<i64: 4, 8>}, {pipeline_mode = #tpu.pipeline_mode<synchronous>, transform_indices = @transform_4, window_bounds = array<i64: 4, 8>}, {pipeline_mode = #tpu.pipeline_mode<synchronous>, transform_indices = @transform_5, window_bounds = array<i64: 1, 8>}, {pipeline_mode = #tpu.pipeline_mode<synchronous>, transform_indices = @transform_6, window_bounds = array<i64: 2, 4, 4>}, {pipeline_mode = #tpu.pipeline_mode<synchronous>, transform_indices = @transform_7, window_bounds = array<i64: 2, 1, 4>}, {pipeline_mode = #tpu.pipeline_mode<synchronous>, transform_indices = @transform_8, window_bounds = array<i64: 2, 12, 4>}, {pipeline_mode = #tpu.pipeline_mode<synchronous>, transform_indices = @transform_9, window_bounds = array<i64: 2, 1, 4>}, {transform_indices = @transform_10, window_bounds = array<i64: 1, 16, 8>}]} {
    %0 = tpu.iota {dimensions = array<i32: 0>} : vector<32x1xi32>
    %c16_i32 = arith.constant 16 : i32
    %1 = arith.muli %arg1, %c16_i32 : i32
    %c8_i32 = arith.constant 8 : i32
    %2 = arith.subi %1, %c8_i32 : i32
    %3 = vector.broadcast %2 : i32 to vector<32x1xi32>
    %4 = arith.addi %3, %0 : vector<32x1xi32>
    %c0_i32 = arith.constant 0 : i32
    %5 = vector.broadcast %c0_i32 : i32 to vector<32x1xi32>
    %6 = arith.cmpi sge, %4, %5 : vector<32x1xi32>
    %c16_i32_0 = arith.constant 16 : i32
    %7 = vector.broadcast %c16_i32_0 : i32 to vector<32x1xi32>
    %8 = arith.cmpi slt, %4, %7 : vector<32x1xi32>
    %9 = arith.andi %6, %8 : vector<32x1xi1>
    %10 = arith.extui %9 : vector<32x1xi1> to vector<32x1xi32>
    %11 = arith.sitofp %10 : vector<32x1xi32> to vector<32x1xf32>
    %c0 = arith.constant 0 : index
    %c0_1 = arith.constant 0 : index
    %c0_2 = arith.constant 0 : index
    %c0_3 = arith.constant 0 : index
    %12 = vector.load %arg2[%c0, %c0_1, %c0_2, %c0_3] : memref<1x1x32x4xbf16, #tpu.memory_space<vmem>>, vector<1x1x32x4xbf16>
    %13 = vector.shape_cast %12 : vector<1x1x32x4xbf16> to vector<32x4xbf16>
    %c0_4 = arith.constant 0 : index
    %c0_5 = arith.constant 0 : index
    %14 = vector.load %arg3[%c0_4, %c0_5] : memref<4x8xbf16, #tpu.memory_space<vmem>>, vector<4x8xbf16>
    %cst = arith.constant dense<0.000000e+00> : vector<32x8xf32>
    %15 = tpu.matmul %13, %14, %cst {dimension_numbers = #tpu.dot_dimension_numbers<[1], [0], [0], [1], [0, 0, 1, 1], [], []>} : vector<32x4xbf16>, vector<4x8xbf16>, vector<32x8xf32> -> vector<32x8xf32>
    %c0_6 = arith.constant 0 : index
    %c0_7 = arith.constant 0 : index
    %16 = vector.load %arg4[%c0_6, %c0_7] : memref<1x8xf32, #tpu.memory_space<vmem>>, vector<1x8xf32>
    %17 = vector.broadcast %16 : vector<1x8xf32> to vector<32x8xf32>
    %18 = arith.addf %15, %17 : vector<32x8xf32>
    %cst_8 = arith.constant 5.000000e-01 : f32
    %19 = vector.broadcast %cst_8 : f32 to vector<32x8xf32>
    %20 = arith.mulf %19, %18 : vector<32x8xf32>
    %cst_9 = arith.constant 5.000000e-01 : f32
    %21 = vector.broadcast %cst_9 : f32 to vector<32x8xf32>
    %22 = arith.mulf %21, %18 : vector<32x8xf32>
    %23 = math.tanh %22 : vector<32x8xf32>
    %cst_10 = arith.constant 1.000000e+00 : f32
    %24 = vector.broadcast %cst_10 : f32 to vector<32x8xf32>
    %25 = arith.addf %24, %23 : vector<32x8xf32>
    %26 = arith.mulf %20, %25 : vector<32x8xf32>
    %27 = vector.extract_strided_slice %26 {offsets = [0, 0], sizes = [32, 4], strides = [1, 1]} : vector<32x8xf32> to vector<32x4xf32>
    %28 = vector.extract_strided_slice %26 {offsets = [8, 4], sizes = [16, 4], strides = [1, 1]} : vector<32x8xf32> to vector<16x4xf32>
    %29 = arith.truncf %28 : vector<16x4xf32> to vector<16x4xbf16>
    %30 = arith.truncf %27 : vector<32x4xf32> to vector<32x4xbf16>
    %c0_11 = arith.constant 0 : index
    %c0_12 = arith.constant 0 : index
    %c0_13 = arith.constant 0 : index
    %31 = vector.load %arg8[%c0_11, %c0_12, %c0_13] : memref<2x4x4xbf16, #tpu.memory_space<vmem>>, vector<1x4x4xbf16>
    %32 = vector.shape_cast %31 : vector<1x4x4xbf16> to vector<4x4xbf16>
    %cst_14 = arith.constant dense<0.000000e+00> : vector<32x4xf32>
    %33 = tpu.matmul %30, %32, %cst_14 {dimension_numbers = #tpu.dot_dimension_numbers<[1], [0], [0], [1], [0, 0, 1, 1], [], []>} : vector<32x4xbf16>, vector<4x4xbf16>, vector<32x4xf32> -> vector<32x4xf32>
    %c0_15 = arith.constant 0 : index
    %c0_16 = arith.constant 0 : index
    %c0_17 = arith.constant 0 : index
    %34 = vector.load %arg9[%c0_15, %c0_16, %c0_17] : memref<2x1x4xf32, #tpu.memory_space<vmem>>, vector<1x1x4xf32>
    %35 = vector.shape_cast %34 : vector<1x1x4xf32> to vector<1x4xf32>
    %36 = vector.broadcast %35 : vector<1x4xf32> to vector<32x4xf32>
    %37 = arith.addf %33, %36 : vector<32x4xf32>
    %cst_18 = arith.constant 5.000000e-01 : f32
    %38 = vector.broadcast %cst_18 : f32 to vector<32x4xf32>
    %39 = arith.mulf %38, %37 : vector<32x4xf32>
    %cst_19 = arith.constant 5.000000e-01 : f32
    %40 = vector.broadcast %cst_19 : f32 to vector<32x4xf32>
    %41 = arith.mulf %40, %37 : vector<32x4xf32>
    %42 = math.tanh %41 : vector<32x4xf32>
    %cst_20 = arith.constant 1.000000e+00 : f32
    %43 = vector.broadcast %cst_20 : f32 to vector<32x4xf32>
    %44 = arith.addf %43, %42 : vector<32x4xf32>
    %45 = arith.mulf %39, %44 : vector<32x4xf32>
    %46 = vector.broadcast %11 : vector<32x1xf32> to vector<32x4xf32>
    %47 = arith.mulf %45, %46 : vector<32x4xf32>
    %c1_i32 = arith.constant 1 : i32
    %48 = tpu.dynamic_rotate %47 by %c1_i32 dim 0 : vector<32x4xf32>, i32 -> vector<32x4xf32>
    %c31_i32 = arith.constant 31 : i32
    %49 = tpu.dynamic_rotate %47 by %c31_i32 dim 0 : vector<32x4xf32>, i32 -> vector<32x4xf32>
    %50 = tpu.concatenate %48, %47, %49 in 1 : vector<32x4xf32>, vector<32x4xf32>, vector<32x4xf32> -> vector<32x12xf32>
    %51 = arith.truncf %50 : vector<32x12xf32> to vector<32x12xbf16>
    %c0_21 = arith.constant 0 : index
    %c0_22 = arith.constant 0 : index
    %c0_23 = arith.constant 0 : index
    %52 = vector.load %arg10[%c0_21, %c0_22, %c0_23] : memref<2x12x4xbf16, #tpu.memory_space<vmem>>, vector<1x12x4xbf16>
    %53 = vector.shape_cast %52 : vector<1x12x4xbf16> to vector<12x4xbf16>
    %cst_24 = arith.constant dense<0.000000e+00> : vector<32x4xf32>
    %54 = tpu.matmul %51, %53, %cst_24 {dimension_numbers = #tpu.dot_dimension_numbers<[1], [0], [0], [1], [0, 0, 1, 1], [], []>} : vector<32x12xbf16>, vector<12x4xbf16>, vector<32x4xf32> -> vector<32x4xf32>
    %c0_25 = arith.constant 0 : index
    %c0_26 = arith.constant 0 : index
    %c0_27 = arith.constant 0 : index
    %55 = vector.load %arg11[%c0_25, %c0_26, %c0_27] : memref<2x1x4xf32, #tpu.memory_space<vmem>>, vector<1x1x4xf32>
    %56 = vector.shape_cast %55 : vector<1x1x4xf32> to vector<1x4xf32>
    %57 = vector.broadcast %56 : vector<1x4xf32> to vector<32x4xf32>
    %58 = arith.addf %54, %57 : vector<32x4xf32>
    %cst_28 = arith.constant 5.000000e-01 : f32
    %59 = vector.broadcast %cst_28 : f32 to vector<32x4xf32>
    %60 = arith.mulf %59, %58 : vector<32x4xf32>
    %cst_29 = arith.constant 5.000000e-01 : f32
    %61 = vector.broadcast %cst_29 : f32 to vector<32x4xf32>
    %62 = arith.mulf %61, %58 : vector<32x4xf32>
    %63 = math.tanh %62 : vector<32x4xf32>
    %cst_30 = arith.constant 1.000000e+00 : f32
    %64 = vector.broadcast %cst_30 : f32 to vector<32x4xf32>
    %65 = arith.addf %64, %63 : vector<32x4xf32>
    %66 = arith.mulf %60, %65 : vector<32x4xf32>
    %67 = arith.addf %27, %66 : vector<32x4xf32>
    %68 = arith.truncf %67 : vector<32x4xf32> to vector<32x4xbf16>
    %c1 = arith.constant 1 : index
    %c0_31 = arith.constant 0 : index
    %c0_32 = arith.constant 0 : index
    %69 = vector.load %arg8[%c1, %c0_31, %c0_32] : memref<2x4x4xbf16, #tpu.memory_space<vmem>>, vector<1x4x4xbf16>
    %70 = vector.shape_cast %69 : vector<1x4x4xbf16> to vector<4x4xbf16>
    %cst_33 = arith.constant dense<0.000000e+00> : vector<32x4xf32>
    %71 = tpu.matmul %68, %70, %cst_33 {dimension_numbers = #tpu.dot_dimension_numbers<[1], [0], [0], [1], [0, 0, 1, 1], [], []>} : vector<32x4xbf16>, vector<4x4xbf16>, vector<32x4xf32> -> vector<32x4xf32>
    %c1_34 = arith.constant 1 : index
    %c0_35 = arith.constant 0 : index
    %c0_36 = arith.constant 0 : index
    %72 = vector.load %arg9[%c1_34, %c0_35, %c0_36] : memref<2x1x4xf32, #tpu.memory_space<vmem>>, vector<1x1x4xf32>
    %73 = vector.shape_cast %72 : vector<1x1x4xf32> to vector<1x4xf32>
    %74 = vector.broadcast %73 : vector<1x4xf32> to vector<32x4xf32>
    %75 = arith.addf %71, %74 : vector<32x4xf32>
    %cst_37 = arith.constant 5.000000e-01 : f32
    %76 = vector.broadcast %cst_37 : f32 to vector<32x4xf32>
    %77 = arith.mulf %76, %75 : vector<32x4xf32>
    %cst_38 = arith.constant 5.000000e-01 : f32
    %78 = vector.broadcast %cst_38 : f32 to vector<32x4xf32>
    %79 = arith.mulf %78, %75 : vector<32x4xf32>
    %80 = math.tanh %79 : vector<32x4xf32>
    %cst_39 = arith.constant 1.000000e+00 : f32
    %81 = vector.broadcast %cst_39 : f32 to vector<32x4xf32>
    %82 = arith.addf %81, %80 : vector<32x4xf32>
    %83 = arith.mulf %77, %82 : vector<32x4xf32>
    %84 = vector.broadcast %11 : vector<32x1xf32> to vector<32x4xf32>
    %85 = arith.mulf %83, %84 : vector<32x4xf32>
    %c1_i32_40 = arith.constant 1 : i32
    %86 = tpu.dynamic_rotate %85 by %c1_i32_40 dim 0 : vector<32x4xf32>, i32 -> vector<32x4xf32>
    %c31_i32_41 = arith.constant 31 : i32
    %87 = tpu.dynamic_rotate %85 by %c31_i32_41 dim 0 : vector<32x4xf32>, i32 -> vector<32x4xf32>
    %88 = tpu.concatenate %86, %85, %87 in 1 : vector<32x4xf32>, vector<32x4xf32>, vector<32x4xf32> -> vector<32x12xf32>
    %89 = arith.truncf %88 : vector<32x12xf32> to vector<32x12xbf16>
    %c1_42 = arith.constant 1 : index
    %c0_43 = arith.constant 0 : index
    %c0_44 = arith.constant 0 : index
    %90 = vector.load %arg10[%c1_42, %c0_43, %c0_44] : memref<2x12x4xbf16, #tpu.memory_space<vmem>>, vector<1x12x4xbf16>
    %91 = vector.shape_cast %90 : vector<1x12x4xbf16> to vector<12x4xbf16>
    %cst_45 = arith.constant dense<0.000000e+00> : vector<32x4xf32>
    %92 = tpu.matmul %89, %91, %cst_45 {dimension_numbers = #tpu.dot_dimension_numbers<[1], [0], [0], [1], [0, 0, 1, 1], [], []>} : vector<32x12xbf16>, vector<12x4xbf16>, vector<32x4xf32> -> vector<32x4xf32>
    %c1_46 = arith.constant 1 : index
    %c0_47 = arith.constant 0 : index
    %c0_48 = arith.constant 0 : index
    %93 = vector.load %arg11[%c1_46, %c0_47, %c0_48] : memref<2x1x4xf32, #tpu.memory_space<vmem>>, vector<1x1x4xf32>
    %94 = vector.shape_cast %93 : vector<1x1x4xf32> to vector<1x4xf32>
    %95 = vector.broadcast %94 : vector<1x4xf32> to vector<32x4xf32>
    %96 = arith.addf %92, %95 : vector<32x4xf32>
    %cst_49 = arith.constant 5.000000e-01 : f32
    %97 = vector.broadcast %cst_49 : f32 to vector<32x4xf32>
    %98 = arith.mulf %97, %96 : vector<32x4xf32>
    %cst_50 = arith.constant 5.000000e-01 : f32
    %99 = vector.broadcast %cst_50 : f32 to vector<32x4xf32>
    %100 = arith.mulf %99, %96 : vector<32x4xf32>
    %101 = math.tanh %100 : vector<32x4xf32>
    %cst_51 = arith.constant 1.000000e+00 : f32
    %102 = vector.broadcast %cst_51 : f32 to vector<32x4xf32>
    %103 = arith.addf %102, %101 : vector<32x4xf32>
    %104 = arith.mulf %98, %103 : vector<32x4xf32>
    %105 = arith.addf %67, %104 : vector<32x4xf32>
    %106 = vector.extract_strided_slice %105 {offsets = [8, 0], sizes = [16, 4], strides = [1, 1]} : vector<32x4xf32> to vector<16x4xf32>
    %107 = arith.truncf %106 : vector<16x4xf32> to vector<16x4xbf16>
    %c0_52 = arith.constant 0 : index
    %c0_53 = arith.constant 0 : index
    %108 = vector.load %arg5[%c0_52, %c0_53] : memref<4x8xbf16, #tpu.memory_space<vmem>>, vector<4x8xbf16>
    %cst_54 = arith.constant dense<0.000000e+00> : vector<16x8xf32>
    %109 = tpu.matmul %107, %108, %cst_54 {dimension_numbers = #tpu.dot_dimension_numbers<[1], [0], [0], [1], [0, 0, 1, 1], [], []>} : vector<16x4xbf16>, vector<4x8xbf16>, vector<16x8xf32> -> vector<16x8xf32>
    %c0_55 = arith.constant 0 : index
    %c0_56 = arith.constant 0 : index
    %110 = vector.load %arg6[%c0_55, %c0_56] : memref<4x8xbf16, #tpu.memory_space<vmem>>, vector<4x8xbf16>
    %cst_57 = arith.constant dense<0.000000e+00> : vector<16x8xf32>
    %111 = tpu.matmul %29, %110, %cst_57 {dimension_numbers = #tpu.dot_dimension_numbers<[1], [0], [0], [1], [0, 0, 1, 1], [], []>} : vector<16x4xbf16>, vector<4x8xbf16>, vector<16x8xf32> -> vector<16x8xf32>
    %112 = arith.addf %109, %111 : vector<16x8xf32>
    %c0_58 = arith.constant 0 : index
    %c0_59 = arith.constant 0 : index
    %113 = vector.load %arg7[%c0_58, %c0_59] : memref<1x8xf32, #tpu.memory_space<vmem>>, vector<1x8xf32>
    %114 = vector.broadcast %113 : vector<1x8xf32> to vector<16x8xf32>
    %115 = arith.addf %112, %114 : vector<16x8xf32>
    %cst_60 = arith.constant 5.000000e-01 : f32
    %116 = vector.broadcast %cst_60 : f32 to vector<16x8xf32>
    %117 = arith.mulf %116, %115 : vector<16x8xf32>
    %cst_61 = arith.constant 5.000000e-01 : f32
    %118 = vector.broadcast %cst_61 : f32 to vector<16x8xf32>
    %119 = arith.mulf %118, %115 : vector<16x8xf32>
    %120 = math.tanh %119 : vector<16x8xf32>
    %cst_62 = arith.constant 1.000000e+00 : f32
    %121 = vector.broadcast %cst_62 : f32 to vector<16x8xf32>
    %122 = arith.addf %121, %120 : vector<16x8xf32>
    %123 = arith.mulf %117, %122 : vector<16x8xf32>
    %c0_63 = arith.constant 0 : index
    %c0_64 = arith.constant 0 : index
    %c0_65 = arith.constant 0 : index
    %124 = vector.load %arg12[%c0_63, %c0_64, %c0_65] : memref<1x16x8xf32, #tpu.memory_space<vmem>>, vector<1x16x8xf32>
    %125 = vector.shape_cast %124 : vector<1x16x8xf32> to vector<16x8xf32>
    %126 = vector.shape_cast %123 : vector<16x8xf32> to vector<1x16x8xf32>
    tpu.vector_store %arg12[%c0_63, %c0_64, %c0_65], %126 {strides = array<i32>} : memref<1x16x8xf32, #tpu.memory_space<vmem>>, vector<1x16x8xf32>,
    return
  }
  func.func @transform_0(%arg0: i32, %arg1: i32) -> (i32, i32, i32, i32) {
    %c0_i32 = arith.constant 0 : i32
    %c0_i32_0 = arith.constant 0 : i32
    %c0_i32_1 = arith.constant 0 : i32
    return %arg0, %arg1, %c0_i32, %c0_i32_0 : i32, i32, i32, i32
  }
  func.func @transform_1(%arg0: i32, %arg1: i32) -> (i32, i32) {
    %c0_i32 = arith.constant 0 : i32
    %c0_i32_0 = arith.constant 0 : i32
    %c0_i32_1 = arith.constant 0 : i32
    return %c0_i32, %c0_i32_0 : i32, i32
  }
  func.func @transform_2(%arg0: i32, %arg1: i32) -> (i32, i32) {
    %c0_i32 = arith.constant 0 : i32
    %c0_i32_0 = arith.constant 0 : i32
    %c0_i32_1 = arith.constant 0 : i32
    return %c0_i32, %c0_i32_0 : i32, i32
  }
  func.func @transform_3(%arg0: i32, %arg1: i32) -> (i32, i32) {
    %c0_i32 = arith.constant 0 : i32
    %c0_i32_0 = arith.constant 0 : i32
    %c0_i32_1 = arith.constant 0 : i32
    return %c0_i32, %c0_i32_0 : i32, i32
  }
  func.func @transform_4(%arg0: i32, %arg1: i32) -> (i32, i32) {
    %c0_i32 = arith.constant 0 : i32
    %c0_i32_0 = arith.constant 0 : i32
    %c0_i32_1 = arith.constant 0 : i32
    return %c0_i32, %c0_i32_0 : i32, i32
  }
  func.func @transform_5(%arg0: i32, %arg1: i32) -> (i32, i32) {
    %c0_i32 = arith.constant 0 : i32
    %c0_i32_0 = arith.constant 0 : i32
    %c0_i32_1 = arith.constant 0 : i32
    return %c0_i32, %c0_i32_0 : i32, i32
  }
  func.func @transform_6(%arg0: i32, %arg1: i32) -> (i32, i32, i32) {
    %c0_i32 = arith.constant 0 : i32
    %c0_i32_0 = arith.constant 0 : i32
    %c0_i32_1 = arith.constant 0 : i32
    %c0_i32_2 = arith.constant 0 : i32
    return %c0_i32, %c0_i32_0, %c0_i32_1 : i32, i32, i32
  }
  func.func @transform_7(%arg0: i32, %arg1: i32) -> (i32, i32, i32) {
    %c0_i32 = arith.constant 0 : i32
    %c0_i32_0 = arith.constant 0 : i32
    %c0_i32_1 = arith.constant 0 : i32
    %c0_i32_2 = arith.constant 0 : i32
    return %c0_i32, %c0_i32_0, %c0_i32_1 : i32, i32, i32
  }
  func.func @transform_8(%arg0: i32, %arg1: i32) -> (i32, i32, i32) {
    %c0_i32 = arith.constant 0 : i32
    %c0_i32_0 = arith.constant 0 : i32
    %c0_i32_1 = arith.constant 0 : i32
    %c0_i32_2 = arith.constant 0 : i32
    return %c0_i32, %c0_i32_0, %c0_i32_1 : i32, i32, i32
  }
  func.func @transform_9(%arg0: i32, %arg1: i32) -> (i32, i32, i32) {
    %c0_i32 = arith.constant 0 : i32
    %c0_i32_0 = arith.constant 0 : i32
    %c0_i32_1 = arith.constant 0 : i32
    %c0_i32_2 = arith.constant 0 : i32
    return %c0_i32, %c0_i32_0, %c0_i32_1 : i32, i32, i32
  }
  func.func @transform_10(%arg0: i32, %arg1: i32) -> (i32, i32, i32) {
    %c0_i32 = arith.constant 0 : i32
    %c0_i32_0 = arith.constant 0 : i32
    return %arg0, %arg1, %c0_i32 : i32, i32, i32
  }
}

</mosaic_0001>

<llo_original>
// kernel: tpu_custom_call.1
$region0: #{tpu_custom_call.1}
  #allocation0 [shape = 'u32[]', space=smem, size = 0x4, offset = 0x4, fixed_abs, tag = 'smem constant byte address 0x4 - core index']
  #allocation1 [shape = 'u32[144,128]{1,0:T(1,128)}', space=vmem, size = 0x12000, scoped, tag = 'internal scratch']
  %s0 = inlined_call_operand.vmem [shape: bf16[2,1,32,4], index: 0, kind: input, shape index: {}]
  %s1 = inlined_call_operand.vmem [shape: bf16[4,8], index: 1, kind: input, shape index: {}]
  %s2 = inlined_call_operand.vmem [shape: f32[1,8], index: 2, kind: input, shape index: {}]
  %s3 = inlined_call_operand.vmem [shape: bf16[4,8], index: 3, kind: input, shape index: {}]
  %s4 = inlined_call_operand.vmem [shape: bf16[4,8], index: 4, kind: input, shape index: {}]
  %s5 = inlined_call_operand.vmem [shape: f32[1,8], index: 5, kind: input, shape index: {}]
  %s6 = inlined_call_operand.vmem [shape: bf16[2,4,4], index: 6, kind: input, shape index: {}]
  %s7 = inlined_call_operand.vmem [shape: f32[2,1,4], index: 7, kind: input, shape index: {}]
  %s8 = inlined_call_operand.vmem [shape: bf16[2,12,4], index: 8, kind: input, shape index: {}]
  %s9 = inlined_call_operand.vmem [shape: f32[2,1,4], index: 9, kind: input, shape index: {}]
  %s10 = inlined_call_operand.vmem [shape: f32[2,16,8], index: 10, kind: output, shape index: {}]
  %s11 = sld [smem:[#allocation0]]
  $region73: #{tpu_custom_call.1} parent=0
    _
  %s13 = ssub.s32 1, %s11
  %s14 = scalar_select 0, %s13, %s11
  loop: start=0, step=1, limit=4
  $region2: #{tpu_custom_call.1} parent=0 // loop_pre_header
    _
  $region3: #{tpu_custom_call.1} parent=0 // loop_header
    %s16 = sphi 0, %s20
    %p17 = scmp.ge.s32.totalorder %s16, 4
    %s23 = sphi 0, %s35
    %s24 = sphi 0, %s31
    %s25 = sphi 0, %s23
    %s26 = sphi 0, %s24
    %s27 = sphi 0, %s25
    %s28 = sphi 0, %s26
    %s40 = sphi 0, %s42
    %s43 = sphi 0, %s40
    %s44 = sphi 0, %s43
    %s60 = sphi 0, %s44
    %s64 = sphi 0, %s64
    %s66 = sphi 0, %s64
    %s67 = sphi 0, %s66
    %s81 = sphi 0, %s67
    %s85 = sphi 0, %s85
    %s87 = sphi 0, %s85
    %s88 = sphi 0, %s87
    %s102 = sphi 0, %s88
    %s106 = sphi 0, %s106
    %s108 = sphi 0, %s106
    %s109 = sphi 0, %s108
    %s123 = sphi 0, %s109
    %s127 = sphi 0, %s127
    %s129 = sphi 0, %s127
    %s130 = sphi 0, %s129
    %s144 = sphi 0, %s130
    %s148 = sphi 0, %s148
    %s150 = sphi 0, %s148
    %s151 = sphi 0, %s150
    %s165 = sphi 0, %s151
    %s169 = sphi 0, %s169
    %s171 = sphi 0, %s169
    %s172 = sphi 0, %s171
    %s186 = sphi 0, %s172
    %s190 = sphi 0, %s190
    %s192 = sphi 0, %s190
    %s193 = sphi 0, %s192
    %s207 = sphi 0, %s193
    %s211 = sphi 0, %s211
    %s213 = sphi 0, %s211
    %s214 = sphi 0, %s213
    %s228 = sphi 0, %s214
    %s232 = sphi 0, %s232
    %s234 = sphi 0, %s232
    %s235 = sphi 0, %s234
    %s249 = sphi 0, %s235
    %s257 = sphi 0, %s259
    %s260 = sphi 0, %s257
    %s261 = sphi 0, %s260
    %s277 = sphi 0, %s261
  $region4: #{tpu_custom_call.1} parent=0 // loop_header_branch
    %19 = sbr.rel (%p17) target = $region8
  $region5: #{tpu_custom_call.1} parent=0 // loop_body
    %s21 = ssub.s32 %s16, 1
    %s22 = ssub.s32 %s16, 2
    %s29 = sadd.s32 1, %s24
    %p30 = scmp.ge.s32.totalorder %s29, 1
    %s31 = scalar_select %p30, 0, %s29
    %s32 = sadd.s32 1, %s23
    %s33 = scalar_select %p30, %s32, %s23
    %p34 = scmp.ge.s32.totalorder %s33, 2
    %s35 = scalar_select %p34, 0, %s33
    %s36 = ssub.s32 %s23, %s35
    %s37 = ssub.s32 %s24, %s31
    %s38 = sor.u32 %s36, %s37
    %p39 = scmp.eq.s32.totalorder %s38, 0
    %s41 = sadd.s32 %s40, 1
    %s42 = scalar_select %p39, %s40, %s41
    %p45 = pneg %p39
    %p46 = scmp.eq.s32.totalorder %s16, 1
    %p47 = por %p45, %p46
    %p48 = scmp.ne.s32.totalorder %s40, %s43
    %p49 = scmp.eq.s32.totalorder %s16, 0
    %p50 = por %p48, %p49
    %p51 = scmp.ne.s32.totalorder %s40, %s43
    %p52 = scmp.eq.s32.totalorder %s21, 1
    %p53 = por %p51, %p52
    %p54 = scmp.ne.s32.totalorder %s43, %s44
    %p55 = scmp.eq.s32.totalorder %s21, 0
    %p56 = por %p54, %p55
    %p57 = scmp.ne.s32.totalorder %s43, %s44
    %p58 = scmp.eq.s32.totalorder %s22, 1
    %p59 = por %p57, %p58
    %p61 = scmp.ne.s32.totalorder %s44, %s60
    %p62 = scmp.eq.s32.totalorder %s22, 0
    %p63 = por %p61, %p62
    %s65 = sadd.s32 %s64, 1
    %p68 = scmp.eq.s32.totalorder %s16, 1
    %p69 = scmp.ne.s32.totalorder %s64, %s66
    %p70 = scmp.eq.s32.totalorder %s16, 0
    %p71 = por %p69, %p70
    %p72 = scmp.ne.s32.totalorder %s64, %s66
    %p73 = scmp.eq.s32.totalorder %s21, 1
    %p74 = por %p72, %p73
    %p75 = scmp.ne.s32.totalorder %s66, %s67
    %p76 = scmp.eq.s32.totalorder %s21, 0
    %p77 = por %p75, %p76
    %p78 = scmp.ne.s32.totalorder %s66, %s67
    %p79 = scmp.eq.s32.totalorder %s22, 1
    %p80 = por %p78, %p79
    %p82 = scmp.ne.s32.totalorder %s67, %s81
    %p83 = scmp.eq.s32.totalorder %s22, 0
    %p84 = por %p82, %p83
    %s86 = sadd.s32 %s85, 1
    %p89 = scmp.eq.s32.totalorder %s16, 1
    %p90 = scmp.ne.s32.totalorder %s85, %s87
    %p91 = scmp.eq.s32.totalorder %s16, 0
    %p92 = por %p90, %p91
    %p93 = scmp.ne.s32.totalorder %s85, %s87
    %p94 = scmp.eq.s32.totalorder %s21, 1
    %p95 = por %p93, %p94
    %p96 = scmp.ne.s32.totalorder %s87, %s88
    %p97 = scmp.eq.s32.totalorder %s21, 0
    %p98 = por %p96, %p97
    %p99 = scmp.ne.s32.totalorder %s87, %s88
    %p100 = scmp.eq.s32.totalorder %s22, 1
    %p101 = por %p99, %p100
    %p103 = scmp.ne.s32.totalorder %s88, %s102
    %p104 = scmp.eq.s32.totalorder %s22, 0
    %p105 = por %p103, %p104
    %s107 = sadd.s32 %s106, 1
    %p110 = scmp.eq.s32.totalorder %s16, 1
    %p111 = scmp.ne.s32.totalorder %s106, %s108
    %p112 = scmp.eq.s32.totalorder %s16, 0
    %p113 = por %p111, %p112
    %p114 = scmp.ne.s32.totalorder %s106, %s108
    %p115 = scmp.eq.s32.totalorder %s21, 1
    %p116 = por %p114, %p115
    %p117 = scmp.ne.s32.totalorder %s108, %s109
    %p118 = scmp.eq.s32.totalorder %s21, 0
    %p119 = por %p117, %p118
    %p120 = scmp.ne.s32.totalorder %s108, %s109
    %p121 = scmp.eq.s32.totalorder %s22, 1
    %p122 = por %p120, %p121
    %p124 = scmp.ne.s32.totalorder %s109, %s123
    %p125 = scmp.eq.s32.totalorder %s22, 0
    %p126 = por %p124, %p125
    %s128 = sadd.s32 %s127, 1
    %p131 = scmp.eq.s32.totalorder %s16, 1
    %p132 = scmp.ne.s32.totalorder %s127, %s129
    %p133 = scmp.eq.s32.totalorder %s16, 0
    %p134 = por %p132, %p133
    %p135 = scmp.ne.s32.totalorder %s127, %s129
    %p136 = scmp.eq.s32.totalorder %s21, 1
    %p137 = por %p135, %p136
    %p138 = scmp.ne.s32.totalorder %s129, %s130
    %p139 = scmp.eq.s32.totalorder %s21, 0
    %p140 = por %p138, %p139
    %p141 = scmp.ne.s32.totalorder %s129, %s130
    %p142 = scmp.eq.s32.totalorder %s22, 1
    %p143 = por %p141, %p142
    %p145 = scmp.ne.s32.totalorder %s130, %s144
    %p146 = scmp.eq.s32.totalorder %s22, 0
    %p147 = por %p145, %p146
    %s149 = sadd.s32 %s148, 1
    %p152 = scmp.eq.s32.totalorder %s16, 1
    %p153 = scmp.ne.s32.totalorder %s148, %s150
    %p154 = scmp.eq.s32.totalorder %s16, 0
    %p155 = por %p153, %p154
    %p156 = scmp.ne.s32.totalorder %s148, %s150
    %p157 = scmp.eq.s32.totalorder %s21, 1
    %p158 = por %p156, %p157
    %p159 = scmp.ne.s32.totalorder %s150, %s151
    %p160 = scmp.eq.s32.totalorder %s21, 0
    %p161 = por %p159, %p160
    %p162 = scmp.ne.s32.totalorder %s150, %s151
    %p163 = scmp.eq.s32.totalorder %s22, 1
    %p164 = por %p162, %p163
    %p166 = scmp.ne.s32.totalorder %s151, %s165
    %p167 = scmp.eq.s32.totalorder %s22, 0
    %p168 = por %p166, %p167
    %s170 = sadd.s32 %s169, 1
    %p173 = scmp.eq.s32.totalorder %s16, 1
    %p174 = scmp.ne.s32.totalorder %s169, %s171
    %p175 = scmp.eq.s32.totalorder %s16, 0
    %p176 = por %p174, %p175
    %p177 = scmp.ne.s32.totalorder %s169, %s171
    %p178 = scmp.eq.s32.totalorder %s21, 1
    %p179 = por %p177, %p178
    %p180 = scmp.ne.s32.totalorder %s171, %s172
    %p181 = scmp.eq.s32.totalorder %s21, 0
    %p182 = por %p180, %p181
    %p183 = scmp.ne.s32.totalorder %s171, %s172
    %p184 = scmp.eq.s32.totalorder %s22, 1
    %p185 = por %p183, %p184
    %p187 = scmp.ne.s32.totalorder %s172, %s186
    %p188 = scmp.eq.s32.totalorder %s22, 0
    %p189 = por %p187, %p188
    %s191 = sadd.s32 %s190, 1
    %p194 = scmp.eq.s32.totalorder %s16, 1
    %p195 = scmp.ne.s32.totalorder %s190, %s192
    %p196 = scmp.eq.s32.totalorder %s16, 0
    %p197 = por %p195, %p196
    %p198 = scmp.ne.s32.totalorder %s190, %s192
    %p199 = scmp.eq.s32.totalorder %s21, 1
    %p200 = por %p198, %p199
    %p201 = scmp.ne.s32.totalorder %s192, %s193
    %p202 = scmp.eq.s32.totalorder %s21, 0
    %p203 = por %p201, %p202
    %p204 = scmp.ne.s32.totalorder %s192, %s193
    %p205 = scmp.eq.s32.totalorder %s22, 1
    %p206 = por %p204, %p205
    %p208 = scmp.ne.s32.totalorder %s193, %s207
    %p209 = scmp.eq.s32.totalorder %s22, 0
    %p210 = por %p208, %p209
    %s212 = sadd.s32 %s211, 1
    %p215 = scmp.eq.s32.totalorder %s16, 1
    %p216 = scmp.ne.s32.totalorder %s211, %s213
    %p217 = scmp.eq.s32.totalorder %s16, 0
    %p218 = por %p216, %p217
    %p219 = scmp.ne.s32.totalorder %s211, %s213
    %p220 = scmp.eq.s32.totalorder %s21, 1
    %p221 = por %p219, %p220
    %p222 = scmp.ne.s32.totalorder %s213, %s214
    %p223 = scmp.eq.s32.totalorder %s21, 0
    %p224 = por %p222, %p223
    %p225 = scmp.ne.s32.totalorder %s213, %s214
    %p226 = scmp.eq.s32.totalorder %s22, 1
    %p227 = por %p225, %p226
    %p229 = scmp.ne.s32.totalorder %s214, %s228
    %p230 = scmp.eq.s32.totalorder %s22, 0
    %p231 = por %p229, %p230
    %s233 = sadd.s32 %s232, 1
    %p236 = scmp.eq.s32.totalorder %s16, 1
    %p237 = scmp.ne.s32.totalorder %s232, %s234
    %p238 = scmp.eq.s32.totalorder %s16, 0
    %p239 = por %p237, %p238
    %p240 = scmp.ne.s32.totalorder %s232, %s234
    %p241 = scmp.eq.s32.totalorder %s21, 1
    %p242 = por %p240, %p241
    %p243 = scmp.ne.s32.totalorder %s234, %s235
    %p244 = scmp.eq.s32.totalorder %s21, 0
    %p245 = por %p243, %p244
    %p246 = scmp.ne.s32.totalorder %s234, %s235
    %p247 = scmp.eq.s32.totalorder %s22, 1
    %p248 = por %p246, %p247
    %p250 = scmp.ne.s32.totalorder %s235, %s249
    %p251 = scmp.eq.s32.totalorder %s22, 0
    %p252 = por %p250, %p251
    %s253 = ssub.s32 %s23, %s35
    %s254 = ssub.s32 %s24, %s31
    %s255 = sor.u32 %s253, %s254
    %p256 = scmp.eq.s32.totalorder %s255, 0
    %s258 = sadd.s32 %s257, 1
    %s259 = scalar_select %p256, %s257, %s258
    %p262 = pneg %p256
    %p263 = scmp.eq.s32.totalorder %s16, 1
    %p264 = por %p262, %p263
    %p265 = scmp.ne.s32.totalorder %s257, %s260
    %p266 = scmp.eq.s32.totalorder %s16, 0
    %p267 = por %p265, %p266
    %p268 = scmp.ne.s32.totalorder %s257, %s260
    %p269 = scmp.eq.s32.totalorder %s21, 1
    %p270 = por %p268, %p269
    %p271 = scmp.ne.s32.totalorder %s260, %s261
    %p272 = scmp.eq.s32.totalorder %s21, 0
    %p273 = por %p271, %p272
    %p274 = scmp.ne.s32.totalorder %s260, %s261
    %p275 = scmp.eq.s32.totalorder %s22, 1
    %p276 = por %p274, %p275
    %p278 = scmp.ne.s32.totalorder %s261, %s277
    %p279 = scmp.eq.s32.totalorder %s22, 0
    %p280 = por %p278, %p279
    %p281 = scmp.le.s32.totalorder 1, %s16
    %p282 = scmp.lt.s32.totalorder %s16, 3
    %p283 = pnand %p281, %p282
    %p284 = pneg %p283
    // Predicated region
    $region9: #{tpu_custom_call.1} parent=5 // pred_check
      _
    $region10: #{tpu_custom_call.1} parent=5 // pred_check_branch
      %286 = sbr.rel (%p283) target = $region12
    $region11: #{tpu_custom_call.1} parent=5 // pred_region
      %s287 = ssub.s32 %s16, 1
      // Predicated region
      $region13: #{tpu_custom_call.1} parent=11 // pred_check
        %p288 = pneg %p77
      $region14: #{tpu_custom_call.1} parent=11 // pred_check_branch
        %290 = sbr.rel (%p288) target = $region16
      $region15: #{tpu_custom_call.1} parent=11 // pred_region
        _
      $region16: #{tpu_custom_call.1} parent=11 // pred_fallthru
        _
      // Predicated region
      $region17: #{tpu_custom_call.1} parent=11 // pred_check
        %p291 = pneg %p98
      $region18: #{tpu_custom_call.1} parent=11 // pred_check_branch
        %293 = sbr.rel (%p291) target = $region20
      $region19: #{tpu_custom_call.1} parent=11 // pred_region
        _
      $region20: #{tpu_custom_call.1} parent=11 // pred_fallthru
        _
      // Predicated region
      $region21: #{tpu_custom_call.1} parent=11 // pred_check
        %p294 = pneg %p119
      $region22: #{tpu_custom_call.1} parent=11 // pred_check_branch
        %296 = sbr.rel (%p294) target = $region24
      $region23: #{tpu_custom_call.1} parent=11 // pred_region
        _
      $region24: #{tpu_custom_call.1} parent=11 // pred_fallthru
        _
      // Predicated region
      $region25: #{tpu_custom_call.1} parent=11 // pred_check
        %p297 = pneg %p140
      $region26: #{tpu_custom_call.1} parent=11 // pred_check_branch
        %299 = sbr.rel (%p297) target = $region28
      $region27: #{tpu_custom_call.1} parent=11 // pred_region
        _
      $region28: #{tpu_custom_call.1} parent=11 // pred_fallthru
        _
      // Predicated region
      $region29: #{tpu_custom_call.1} parent=11 // pred_check
        %p300 = pneg %p161
      $region30: #{tpu_custom_call.1} parent=11 // pred_check_branch
        %302 = sbr.rel (%p300) target = $region32
      $region31: #{tpu_custom_call.1} parent=11 // pred_region
        _
      $region32: #{tpu_custom_call.1} parent=11 // pred_fallthru
        _
      // Predicated region
      $region33: #{tpu_custom_call.1} parent=11 // pred_check
        %p303 = pneg %p182
      $region34: #{tpu_custom_call.1} parent=11 // pred_check_branch
        %305 = sbr.rel (%p303) target = $region36
      $region35: #{tpu_custom_call.1} parent=11 // pred_region
        _
      $region36: #{tpu_custom_call.1} parent=11 // pred_fallthru
        _
      // Predicated region
      $region37: #{tpu_custom_call.1} parent=11 // pred_check
        %p306 = pneg %p203
      $region38: #{tpu_custom_call.1} parent=11 // pred_check_branch
        %308 = sbr.rel (%p306) target = $region40
      $region39: #{tpu_custom_call.1} parent=11 // pred_region
        _
      $region40: #{tpu_custom_call.1} parent=11 // pred_fallthru
        _
      // Predicated region
      $region41: #{tpu_custom_call.1} parent=11 // pred_check
        %p309 = pneg %p224
      $region42: #{tpu_custom_call.1} parent=11 // pred_check_branch
        %311 = sbr.rel (%p309) target = $region44
      $region43: #{tpu_custom_call.1} parent=11 // pred_region
        _
      $region44: #{tpu_custom_call.1} parent=11 // pred_fallthru
        _
      // Predicated region
      $region45: #{tpu_custom_call.1} parent=11 // pred_check
        %p312 = pneg %p245
      $region46: #{tpu_custom_call.1} parent=11 // pred_check_branch
        %314 = sbr.rel (%p312) target = $region48
      $region47: #{tpu_custom_call.1} parent=11 // pred_region
        _
      $region48: #{tpu_custom_call.1} parent=11 // pred_fallthru
        _
    $region12: #{tpu_custom_call.1} parent=5 // pred_fallthru
      _
    %p315 = scmp.lt.s32.totalorder %s16, 2
    // Predicated region
    $region49: #{tpu_custom_call.1} parent=5 // pred_check
      %p316 = pneg %p315
    $region50: #{tpu_custom_call.1} parent=5 // pred_check_branch
      %318 = sbr.rel (%p316) target = $region52
    $region51: #{tpu_custom_call.1} parent=5 // pred_region
      // Predicated region
      $region53: #{tpu_custom_call.1} parent=51 // pred_check
        %p319 = pneg %p50
      $region54: #{tpu_custom_call.1} parent=51 // pred_check_branch
        %321 = sbr.rel (%p319) target = $region56
      $region55: #{tpu_custom_call.1} parent=51 // pred_region
        %p322 = scmp.lt.s32.totalorder %s23, 1
        %s323 = scalar_select %p322, %s23, 1
        %p324 = scmp.lt.s32.totalorder %s24, 0
        %s325 = scalar_select %p324, %s24, 0
        %s326 = smul.addr %s325, 4
        %s327 = smul.addr %s323, 4
        %s328 = sadd.s32 %s326, %s327
        %s329 = smul.addr %s328, 4
        %s330 = scalar_lea.vmem %s0, %s329
      $region56: #{tpu_custom_call.1} parent=51 // pred_fallthru
        _
    $region52: #{tpu_custom_call.1} parent=5 // pred_fallthru
      _
    %p331 = scmp.le.s32.totalorder 1, %s16
    %p332 = scmp.lt.s32.totalorder %s16, 3
    %p333 = pnand %p331, %p332
    %p334 = pneg %p333
    // Predicated region
    $region57: #{tpu_custom_call.1} parent=5 // pred_check
      _
    $region58: #{tpu_custom_call.1} parent=5 // pred_check_branch
      %336 = sbr.rel (%p333) target = $region60
    $region59: #{tpu_custom_call.1} parent=5 // pred_region
      %s337 = ssub.s32 %s16, 1
      %p338 = scmp.lt.s32.totalorder %s25, 1
      %s339 = scalar_select %p338, %s25, 1
      %p340 = scmp.lt.s32.totalorder %s26, 0
      %s341 = scalar_select %p340, %s26, 0
      %s342 = smul.addr %s341, 4
      %s343 = smul.addr %s339, 4
      %s344 = sadd.s32 %s342, %s343
      %s345 = smul.addr %s344, 4
      %s346 = scalar_lea.vmem %s0, %s345
      %p347 = pneg %p56
      %p348 = pneg %p53
      %p349 = pneg %p77
      %p350 = pneg %p74
      %p351 = pneg %p98
      %p352 = pneg %p95
      %p353 = pneg %p119
      %p354 = pneg %p116
      %p355 = pneg %p140
      %p356 = pneg %p137
      %p357 = pneg %p161
      %p358 = pneg %p158
      %p359 = pneg %p182
      %p360 = pneg %p179
      %p361 = pneg %p203
      %p362 = pneg %p200
      %p363 = pneg %p224
      %p364 = pneg %p221
      %p365 = pneg %p245
      %p366 = pneg %p242
      %p367 = pneg %p273
      %p368 = pneg %p270
      %s369 = smul.u32 2, %s26
      %p370 = scmp.lt.s32.totalorder %s25, 1
      %s371 = scalar_select %p370, %s25, 1
      %p372 = scmp.lt.s32.totalorder %s369, 1
      %s373 = scalar_select %p372, %s369, 1
      %s374 = smul.addr %s371, 2
      %s375 = sadd.s32 %s373, %s374
      %s376 = smul.addr %s375, 8
      %s377 = scalar_lea.vmem %s10, %s376
      %p378 = scmp.lt.s32.totalorder %s25, 1
      %s379 = scalar_select %p378, %s25, 1
      %p380 = scmp.lt.s32.totalorder %s26, 0
      %s381 = scalar_select %p380, %s26, 0
      %s382 = smul.addr %s381, 4
      %s383 = smul.addr %s379, 4
      %s384 = sadd.s32 %s382, %s383
      %s385 = smul.addr %s384, 4
      %s386 = scalar_lea.vmem %s0, %s385
      %s387 = smul.u32 2, %s26
      %p388 = scmp.lt.s32.totalorder %s25, 1
      %s389 = scalar_select %p388, %s25, 1
      %p390 = scmp.lt.s32.totalorder %s387, 1
      %s391 = scalar_select %p390, %s387, 1
      %s392 = smul.addr %s389, 2
      %s393 = sadd.s32 %s391, %s392
      %s394 = smul.addr %s393, 8
      %s395 = scalar_lea.vmem %s10, %s394
      %s396 = smul.u32 2, %s26
      %v398 = vlaneseq
      %v399 = vshrl.u32 %v398, 7
      %v400 = vadd.s32 %v399, 8
      %v401 = vadd.s32 %v399, 16
      %v402 = vadd.s32 %v399, 24
      %s403 = smul.u32 %s26, 16
      %s404 = ssub.s32 %s403, 8
      %v405 = vstv %s404
      %v406 = vadd.s32 %v405, %v399
      %v407 = vadd.s32 %v405, %v400
      %v408 = vadd.s32 %v405, %v401
      %v409 = vadd.s32 %v405, %v402
      %vm410 = vcmp.ge.s32.totalorder %v406, 0
      %vm411 = vcmp.ge.s32.totalorder %v407, 0
      %vm412 = vcmp.ge.s32.totalorder %v408, 0
      %vm413 = vcmp.ge.s32.totalorder %v409, 0
      %vm414 = vcmp.lt.s32.totalorder %v406, 16
      %vm415 = vcmp.lt.s32.totalorder %v407, 16
      %vm416 = vcmp.lt.s32.totalorder %v408, 16
      %vm417 = vcmp.lt.s32.totalorder %v409, 16
      %vm418 = vmand %vm410, %vm414
      %vm419 = vmand %vm411, %vm415
      %vm420 = vmand %vm412, %vm416
      %vm421 = vmand %vm413, %vm417
      %v422 = vsel %vm418, 1, 0
      %v423 = vsel %vm419, 1, 0
      %v424 = vsel %vm420, 1, 0
      %v425 = vsel %vm421, 1, 0
      %v426 = vcvt.s32.f32 %v422
      %v427 = vcvt.s32.f32 %v423
      %v428 = vcvt.s32.f32 %v424
      %v429 = vcvt.s32.f32 %v425
      %v430 = vld [vmem:[%s386] sm:$0xf]
      %v431 = vld [vmem:[%s386 + $0x4] sm:$0xf]
      %v432 = vld [vmem:[%s386 + $0x8] sm:$0xf]
      %v433 = vld [vmem:[%s386 + $0xc] sm:$0xf]
      %v434 = vld [vmem:[%s1] sm:$0x3]
      %v435 = vld [vmem:[%s2] sm:$0x1]
      %v437 = vlaneseq
      %v438 = vshrl.u32 %v437, 7
      %v439 = vsub.s32 0, %v438
      %v440 = vrot.slane %v435, %v439
      %v446 = vunpack.c.l.b16 %v430
      %v447 = vunpack.c.l.b16 %v431
      %v448 = vunpack.c.l.b16 %v432
      %v449 = vunpack.c.l.b16 %v433
      %v450 = vpack.c.b16 %v447, %v446
      %v451 = vpack.c.b16 %v449, %v448
      %vm452 = vcmask 31744
      %v454 = vsel %vm452, %v450, 0
      %v457 = vsel %vm452, %v451, 0
      %vm459 = vcmask 1041408
      %v461 = vsel %vm459, %v434, 0
      %463 = vmatprep.subr.bf16.mxu0 0
      %464 = vmatpush1.bf16.msra.mxu0 %v461
      %465 = vmatprep.subr.bf16.mxu0 0
      %466 = vmatpush1.bf16.msra.mxu0 0
      %467 = vmatprep.subr.bf16.mxu0 0
      %468 = vmatpush1.bf16.msra.mxu0 0
      %469 = vmatprep.subr.bf16.mxu0 0
      %470 = vmatpush1.bf16.msra.mxu0 0
      %471 = vmatprep.subr.bf16.mxu0 0
      %472 = vmatpush1.bf16.msra.mxu0 0
      %473 = vmatprep.subr.bf16.mxu0 0
      %474 = vmatpush1.bf16.msra.mxu0 0
      %475 = vmatprep.subr.bf16.mxu0 0
      %476 = vmatpush1.bf16.msra.mxu0 0
      %477 = vmatprep.subr.bf16.mxu0 0
      %478 = vmatpush1.bf16.msra.mxu0 0
      %479 = vmatprep.subr.bf16.mxu0 0
      %480 = vmatpush1.bf16.msra.mxu0 0
      %481 = vmatprep.subr.bf16.mxu0 0
      %482 = vmatpush1.bf16.msra.mxu0 0
      %483 = vmatprep.subr.bf16.mxu0 0
      %484 = vmatpush1.bf16.msra.mxu0 0
      %485 = vmatprep.subr.bf16.mxu0 0
      %486 = vmatpush1.bf16.msra.mxu0 0
      %487 = vmatprep.subr.bf16.mxu0 0
      %488 = vmatpush1.bf16.msra.mxu0 0
      %489 = vmatprep.subr.bf16.mxu0 0
      %490 = vmatpush1.bf16.msra.mxu0 0
      %491 = vmatprep.subr.bf16.mxu0 0
      %492 = vmatpush1.bf16.msra.mxu0 0
      %493 = vmatprep.subr.bf16.mxu0 0
      %494 = vmatpush1.bf16.msra.mxu0 0
      %495 = vmatprep.mubr.bf16.mxu0 0
      %496 = vmatmul.mubr.bf16.gmra.mrb[0].mxu0 %v454
      %v497 = vpop.f32.mrb[0].mxu0
      %v498 = vadd.f32 %v440, %v497
      %v499 = vpop.f32.mrb[0].mxu0
      %v500 = vpop.f32.mrb[0].mxu0
      %v501 = vadd.f32 %v440, %v500
      %v502 = vpop.f32.mrb[0].mxu0
      %503 = vmatprep.mubr.bf16.mxu0 0
      %504 = vmatmul.mubr.bf16.gmra.mrb[0].mxu0 %v457
      %v505 = vpop.f32.mrb[0].mxu0
      %v506 = vadd.f32 %v440, %v505
      %v507 = vpop.f32.mrb[0].mxu0
      %v508 = vpop.f32.mrb[0].mxu0
      %v509 = vadd.f32 %v440, %v508
      %v510 = vpop.f32.mrb[0].mxu0
      %511 = vdwg.mxu0
      %v512 = vmul.f32 %v498, 0.5
      %v513 = vmul.f32 %v501, 0.5
      %v514 = vmul.f32 %v506, 0.5
      %v515 = vmul.f32 %v509, 0.5
      %v516 = vtanh.pop %v512
      %v517 = vtanh.pop %v513
      %v518 = vtanh.pop %v514
      %v519 = vtanh.pop %v515
      %v520 = vadd.f32 %v516, 1.0
      %v521 = vadd.f32 %v517, 1.0
      %v522 = vadd.f32 %v518, 1.0
      %v523 = vadd.f32 %v519, 1.0
      %v524 = vmul.f32 %v512, %v520
      %v525 = vmul.f32 %v513, %v521
      %v526 = vmul.f32 %v514, %v522
      %v527 = vmul.f32 %v515, %v523
      %v528 = vpack.c.bf16 %v526, %v525
      %v529 = vpack.c.bf16 %v525, %v524
      %v530 = vpack.c.bf16 %v527, %v526
      %v531 = vld [vmem:[%s6] sm:$0x3]
      %v532 = vld [vmem:[%s7] sm:$0x1]
      %v534 = vlaneseq
      %v535 = vshrl.u32 %v534, 7
      %v536 = vsub.s32 0, %v535
      %v537 = vrot.slane %v532, %v536
      %v540 = vsel %vm452, %v529, 0
      %v543 = vsel %vm452, %v530, 0
      %v546 = vsel %vm459, %v531, 0
      %548 = vmatprep.subr.bf16.mxu0 0
      %549 = vmatpush1.bf16.msra.mxu0 %v546
      %550 = vmatprep.subr.bf16.mxu0 0
      %551 = vmatpush1.bf16.msra.mxu0 0
      %552 = vmatprep.subr.bf16.mxu0 0
      %553 = vmatpush1.bf16.msra.mxu0 0
      %554 = vmatprep.subr.bf16.mxu0 0
      %555 = vmatpush1.bf16.msra.mxu0 0
      %556 = vmatprep.subr.bf16.mxu0 0
      %557 = vmatpush1.bf16.msra.mxu0 0
      %558 = vmatprep.subr.bf16.mxu0 0
      %559 = vmatpush1.bf16.msra.mxu0 0
      %560 = vmatprep.subr.bf16.mxu0 0
      %561 = vmatpush1.bf16.msra.mxu0 0
      %562 = vmatprep.subr.bf16.mxu0 0
      %563 = vmatpush1.bf16.msra.mxu0 0
      %564 = vmatprep.subr.bf16.mxu0 0
      %565 = vmatpush1.bf16.msra.mxu0 0
      %566 = vmatprep.subr.bf16.mxu0 0
      %567 = vmatpush1.bf16.msra.mxu0 0
      %568 = vmatprep.subr.bf16.mxu0 0
      %569 = vmatpush1.bf16.msra.mxu0 0
      %570 = vmatprep.subr.bf16.mxu0 0
      %571 = vmatpush1.bf16.msra.mxu0 0
      %572 = vmatprep.subr.bf16.mxu0 0
      %573 = vmatpush1.bf16.msra.mxu0 0
      %574 = vmatprep.subr.bf16.mxu0 0
      %575 = vmatpush1.bf16.msra.mxu0 0
      %576 = vmatprep.subr.bf16.mxu0 0
      %577 = vmatpush1.bf16.msra.mxu0 0
      %578 = vmatprep.subr.bf16.mxu0 0
      %579 = vmatpush1.bf16.msra.mxu0 0
      %580 = vmatprep.mubr.bf16.mxu0 0
      %581 = vmatmul.mubr.bf16.gmra.mrb[0].mxu0 %v540
      %v582 = vpop.f32.mrb[0].mxu0
      %v583 = vadd.f32 %v537, %v582
      %v584 = vpop.f32.mrb[0].mxu0
      %v585 = vpop.f32.mrb[0].mxu0
      %v586 = vadd.f32 %v537, %v585
      %v587 = vpop.f32.mrb[0].mxu0
      %588 = vmatprep.mubr.bf16.mxu0 0
      %589 = vmatmul.mubr.bf16.gmra.mrb[0].mxu0 %v543
      %v590 = vpop.f32.mrb[0].mxu0
      %v591 = vadd.f32 %v537, %v590
      %v592 = vpop.f32.mrb[0].mxu0
      %v593 = vpop.f32.mrb[0].mxu0
      %v594 = vadd.f32 %v537, %v593
      %v595 = vpop.f32.mrb[0].mxu0
      %596 = vdwg.mxu0
      %v597 = vmul.f32 %v583, 0.5
      %v598 = vmul.f32 %v586, 0.5
      %v599 = vmul.f32 %v591, 0.5
      %v600 = vmul.f32 %v594, 0.5
      %v601 = vtanh.pop %v597
      %v602 = vtanh.pop %v598
      %v603 = vtanh.pop %v599
      %v604 = vtanh.pop %v600
      %v605 = vadd.f32 %v601, 1.0
      %v606 = vadd.f32 %v602, 1.0
      %v607 = vadd.f32 %v603, 1.0
      %v608 = vadd.f32 %v604, 1.0
      %v609 = vmul.f32 %v597, %v605
      %v610 = vmul.f32 %v598, %v606
      %v611 = vmul.f32 %v599, %v607
      %v612 = vmul.f32 %v600, %v608
      %v613 = vmul.f32 %v609, %v426
      %v614 = vmul.f32 %v610, %v427
      %v615 = vmul.f32 %v611, %v428
      %v616 = vmul.f32 %v612, %v429
      %v617 = vrot.slane %v613, 7
      %v618 = vrot.slane %v614, 7
      %v619 = vrot.slane %v615, 7
      %v620 = vrot.slane %v616, 7
      %vm621 = vcmp.lt.s32.totalorder %v399, 1
      %v622 = vsel %vm621, %v619, %v620
      %v623 = vsel %vm621, %v618, %v619
      %v624 = vsel %vm621, %v617, %v618
      %v625 = vsel %vm621, %v620, %v617
      %v626 = vrot.slane %v613, 1
      %v627 = vrot.slane %v614, 1
      %v628 = vrot.slane %v615, 1
      %v629 = vrot.slane %v616, 1
      %vm630 = vcmp.lt.s32.totalorder %v399, 7
      %v631 = vsel %vm630, %v628, %v629
      %v632 = vsel %vm630, %v627, %v628
      %v633 = vsel %vm630, %v626, %v627
      %v634 = vsel %vm630, %v629, %v626
      %639 = vrot.lane.b32.xlu0 %v613, 4
      %v640 = vpop.permute.xlu0 %639
      %641 = vrot.lane.b32.xlu0 %v614, 4
      %v642 = vpop.permute.xlu0 %641
      %643 = vrot.lane.b32.xlu0 %v615, 4
      %v644 = vpop.permute.xlu0 %643
      %645 = vrot.lane.b32.xlu0 %v616, 4
      %v646 = vpop.permute.xlu0 %645
      %655 = vrot.lane.b32.xlu0 %v633, 8
      %v656 = vpop.permute.xlu0 %655
      %657 = vrot.lane.b32.xlu0 %v632, 8
      %v658 = vpop.permute.xlu0 %657
      %659 = vrot.lane.b32.xlu0 %v631, 8
      %v660 = vpop.permute.xlu0 %659
      %661 = vrot.lane.b32.xlu0 %v634, 8
      %v662 = vpop.permute.xlu0 %661
      %v667 = vsel %vm452, %v625, %v640
      %v668 = vsel %vm452, %v624, %v642
      %v669 = vsel %vm452, %v623, %v644
      %v670 = vsel %vm452, %v622, %v646
      %vm671 = vcmask 64512
      %v672 = vsel %vm671, %v667, %v656
      %v673 = vsel %vm671, %v668, %v658
      %v674 = vsel %vm671, %v669, %v660
      %v675 = vsel %vm671, %v670, %v662
      %v676 = vpack.c.bf16 %v673, %v672
      %v677 = vpack.c.bf16 %v675, %v674
      %v678 = vld [vmem:[%s8] sm:$0xf]
      %v679 = vld [vmem:[%s8 + $0x4] sm:$0x3]
      %v680 = vld [vmem:[%s9] sm:$0x1]
      %v682 = vlaneseq
      %v683 = vshrl.u32 %v682, 7
      %v684 = vsub.s32 0, %v683
      %v685 = vrot.slane %v680, %v684
      %v689 = vunpack.c.l.b16 %v678
      %v690 = vunpack.c.l.b16 %v679
      %v691 = vpack.c.b16 %v690, %v689
      %vm692 = vcmask 97280
      %v694 = vsel %vm692, %v676, 0
      %v697 = vsel %vm692, %v677, 0
      %vm699 = vcmask 1045504
      %v701 = vsel %vm699, %v691, 0
      %703 = vmatprep.subr.bf16.mxu0 0
      %704 = vmatpush1.bf16.msra.mxu0 %v701
      %705 = vmatprep.subr.bf16.mxu0 0
      %706 = vmatpush1.bf16.msra.mxu0 0
      %707 = vmatprep.subr.bf16.mxu0 0
      %708 = vmatpush1.bf16.msra.mxu0 0
      %709 = vmatprep.subr.bf16.mxu0 0
      %710 = vmatpush1.bf16.msra.mxu0 0
      %711 = vmatprep.subr.bf16.mxu0 0
      %712 = vmatpush1.bf16.msra.mxu0 0
      %713 = vmatprep.subr.bf16.mxu0 0
      %714 = vmatpush1.bf16.msra.mxu0 0
      %715 = vmatprep.subr.bf16.mxu0 0
      %716 = vmatpush1.bf16.msra.mxu0 0
      %717 = vmatprep.subr.bf16.mxu0 0
      %718 = vmatpush1.bf16.msra.mxu0 0
      %719 = vmatprep.subr.bf16.mxu0 0
      %720 = vmatpush1.bf16.msra.mxu0 0
      %721 = vmatprep.subr.bf16.mxu0 0
      %722 = vmatpush1.bf16.msra.mxu0 0
      %723 = vmatprep.subr.bf16.mxu0 0
      %724 = vmatpush1.bf16.msra.mxu0 0
      %725 = vmatprep.subr.bf16.mxu0 0
      %726 = vmatpush1.bf16.msra.mxu0 0
      %727 = vmatprep.subr.bf16.mxu0 0
      %728 = vmatpush1.bf16.msra.mxu0 0
      %729 = vmatprep.subr.bf16.mxu0 0
      %730 = vmatpush1.bf16.msra.mxu0 0
      %731 = vmatprep.subr.bf16.mxu0 0
      %732 = vmatpush1.bf16.msra.mxu0 0
      %733 = vmatprep.subr.bf16.mxu0 0
      %734 = vmatpush1.bf16.msra.mxu0 0
      %735 = vmatprep.mubr.bf16.mxu0 0
      %736 = vmatmul.mubr.bf16.gmra.mrb[0].mxu0 %v694
      %v737 = vpop.f32.mrb[0].mxu0
      %v738 = vadd.f32 %v685, %v737
      %v739 = vpop.f32.mrb[0].mxu0
      %v740 = vpop.f32.mrb[0].mxu0
      %v741 = vadd.f32 %v685, %v740
      %v742 = vpop.f32.mrb[0].mxu0
      %743 = vmatprep.mubr.bf16.mxu0 0
      %744 = vmatmul.mubr.bf16.gmra.mrb[0].mxu0 %v697
      %v745 = vpop.f32.mrb[0].mxu0
      %v746 = vadd.f32 %v685, %v745
      %v747 = vpop.f32.mrb[0].mxu0
      %v748 = vpop.f32.mrb[0].mxu0
      %v749 = vadd.f32 %v685, %v748
      %v750 = vpop.f32.mrb[0].mxu0
      %751 = vdwg.mxu0
      %v752 = vmul.f32 %v738, 0.5
      %v753 = vmul.f32 %v741, 0.5
      %v754 = vmul.f32 %v746, 0.5
      %v755 = vmul.f32 %v749, 0.5
      %v756 = vtanh.pop %v752
      %v757 = vtanh.pop %v753
      %v758 = vtanh.pop %v754
      %v759 = vtanh.pop %v755
      %v760 = vadd.f32 %v756, 1.0
      %v761 = vadd.f32 %v757, 1.0
      %v762 = vadd.f32 %v758, 1.0
      %v763 = vadd.f32 %v759, 1.0
      %v764 = vmul.f32 %v752, %v760
      %v765 = vmul.f32 %v753, %v761
      %v766 = vmul.f32 %v754, %v762
      %v767 = vmul.f32 %v755, %v763
      %v768 = vadd.f32 %v524, %v764
      %v769 = vadd.f32 %v525, %v765
      %v770 = vadd.f32 %v526, %v766
      %v771 = vadd.f32 %v527, %v767
      %v772 = vpack.c.bf16 %v769, %v768
      %v773 = vpack.c.bf16 %v771, %v770
      %s774 = scalar_lea.vmem %s6, 2
      %v775 = vld [vmem:[%s774] sm:$0x3]
      %s776 = scalar_lea.vmem %s7, 1
      %v777 = vld [vmem:[%s776] sm:$0x1]
      %v779 = vlaneseq
      %v780 = vshrl.u32 %v779, 7
      %v781 = vsub.s32 0, %v780
      %v782 = vrot.slane %v777, %v781
      %v785 = vsel %vm452, %v772, 0
      %v788 = vsel %vm452, %v773, 0
      %v791 = vsel %vm459, %v775, 0
      %793 = vmatprep.subr.bf16.mxu0 0
      %794 = vmatpush1.bf16.msra.mxu0 %v791
      %795 = vmatprep.subr.bf16.mxu0 0
      %796 = vmatpush1.bf16.msra.mxu0 0
      %797 = vmatprep.subr.bf16.mxu0 0
      %798 = vmatpush1.bf16.msra.mxu0 0
      %799 = vmatprep.subr.bf16.mxu0 0
      %800 = vmatpush1.bf16.msra.mxu0 0
      %801 = vmatprep.subr.bf16.mxu0 0
      %802 = vmatpush1.bf16.msra.mxu0 0
      %803 = vmatprep.subr.bf16.mxu0 0
      %804 = vmatpush1.bf16.msra.mxu0 0
      %805 = vmatprep.subr.bf16.mxu0 0
      %806 = vmatpush1.bf16.msra.mxu0 0
      %807 = vmatprep.subr.bf16.mxu0 0
      %808 = vmatpush1.bf16.msra.mxu0 0
      %809 = vmatprep.subr.bf16.mxu0 0
      %810 = vmatpush1.bf16.msra.mxu0 0
      %811 = vmatprep.subr.bf16.mxu0 0
      %812 = vmatpush1.bf16.msra.mxu0 0
      %813 = vmatprep.subr.bf16.mxu0 0
      %814 = vmatpush1.bf16.msra.mxu0 0
      %815 = vmatprep.subr.bf16.mxu0 0
      %816 = vmatpush1.bf16.msra.mxu0 0
      %817 = vmatprep.subr.bf16.mxu0 0
      %818 = vmatpush1.bf16.msra.mxu0 0
      %819 = vmatprep.subr.bf16.mxu0 0
      %820 = vmatpush1.bf16.msra.mxu0 0
      %821 = vmatprep.subr.bf16.mxu0 0
      %822 = vmatpush1.bf16.msra.mxu0 0
      %823 = vmatprep.subr.bf16.mxu0 0
      %824 = vmatpush1.bf16.msra.mxu0 0
      %825 = vmatprep.mubr.bf16.mxu0 0
      %826 = vmatmul.mubr.bf16.gmra.mrb[0].mxu0 %v785
      %v827 = vpop.f32.mrb[0].mxu0
      %v828 = vadd.f32 %v782, %v827
      %v829 = vpop.f32.mrb[0].mxu0
      %v830 = vpop.f32.mrb[0].mxu0
      %v831 = vadd.f32 %v782, %v830
      %v832 = vpop.f32.mrb[0].mxu0
      %833 = vmatprep.mubr.bf16.mxu0 0
      %834 = vmatmul.mubr.bf16.gmra.mrb[0].mxu0 %v788
      %v835 = vpop.f32.mrb[0].mxu0
      %v836 = vadd.f32 %v782, %v835
      %v837 = vpop.f32.mrb[0].mxu0
      %v838 = vpop.f32.mrb[0].mxu0
      %v839 = vadd.f32 %v782, %v838
      %v840 = vpop.f32.mrb[0].mxu0
      %841 = vdwg.mxu0
      %v842 = vmul.f32 %v828, 0.5
      %v843 = vmul.f32 %v831, 0.5
      %v844 = vmul.f32 %v836, 0.5
      %v845 = vmul.f32 %v839, 0.5
      %v846 = vtanh.pop %v842
      %v847 = vtanh.pop %v843
      %v848 = vtanh.pop %v844
      %v849 = vtanh.pop %v845
      %v850 = vadd.f32 %v846, 1.0
      %v851 = vadd.f32 %v847, 1.0
      %v852 = vadd.f32 %v848, 1.0
      %v853 = vadd.f32 %v849, 1.0
      %v854 = vmul.f32 %v842, %v850
      %v855 = vmul.f32 %v843, %v851
      %v856 = vmul.f32 %v844, %v852
      %v857 = vmul.f32 %v845, %v853
      %v858 = vmul.f32 %v854, %v426
      %v859 = vmul.f32 %v855, %v427
      %v860 = vmul.f32 %v856, %v428
      %v861 = vmul.f32 %v857, %v429
      %v862 = vrot.slane %v858, 7
      %v863 = vrot.slane %v859, 7
      %v864 = vrot.slane %v860, 7
      %v865 = vrot.slane %v861, 7
      %v866 = vsel %vm621, %v864, %v865
      %v867 = vsel %vm621, %v863, %v864
      %v868 = vsel %vm621, %v862, %v863
      %v869 = vsel %vm621, %v865, %v862
      %v870 = vrot.slane %v858, 1
      %v871 = vrot.slane %v859, 1
      %v872 = vrot.slane %v860, 1
      %v873 = vrot.slane %v861, 1
      %v874 = vsel %vm630, %v872, %v873
      %v875 = vsel %vm630, %v871, %v872
      %v876 = vsel %vm630, %v870, %v871
      %v877 = vsel %vm630, %v873, %v870
      %882 = vrot.lane.b32.xlu0 %v858, 4
      %v883 = vpop.permute.xlu0 %882
      %884 = vrot.lane.b32.xlu0 %v859, 4
      %v885 = vpop.permute.xlu0 %884
      %886 = vrot.lane.b32.xlu0 %v860, 4
      %v887 = vpop.permute.xlu0 %886
      %888 = vrot.lane.b32.xlu0 %v861, 4
      %v889 = vpop.permute.xlu0 %888
      %898 = vrot.lane.b32.xlu0 %v876, 8
      %v899 = vpop.permute.xlu0 %898
      %900 = vrot.lane.b32.xlu0 %v875, 8
      %v901 = vpop.permute.xlu0 %900
      %902 = vrot.lane.b32.xlu0 %v874, 8
      %v903 = vpop.permute.xlu0 %902
      %904 = vrot.lane.b32.xlu0 %v877, 8
      %v905 = vpop.permute.xlu0 %904
      %v910 = vsel %vm452, %v869, %v883
      %v911 = vsel %vm452, %v868, %v885
      %v912 = vsel %vm452, %v867, %v887
      %v913 = vsel %vm452, %v866, %v889
      %v914 = vsel %vm671, %v910, %v899
      %v915 = vsel %vm671, %v911, %v901
      %v916 = vsel %vm671, %v912, %v903
      %v917 = vsel %vm671, %v913, %v905
      %v918 = vpack.c.bf16 %v915, %v914
      %v919 = vpack.c.bf16 %v917, %v916
      %s920 = scalar_lea.vmem %s8, 8
      %v921 = vld [vmem:[%s920] sm:$0xf]
      %v922 = vld [vmem:[%s920 + $0x4] sm:$0x3]
      %s923 = scalar_lea.vmem %s9, 1
      %v924 = vld [vmem:[%s923] sm:$0x1]
      %v926 = vlaneseq
      %v927 = vshrl.u32 %v926, 7
      %v928 = vsub.s32 0, %v927
      %v929 = vrot.slane %v924, %v928
      %v933 = vunpack.c.l.b16 %v921
      %v934 = vunpack.c.l.b16 %v922
      %v935 = vpack.c.b16 %v934, %v933
      %v937 = vsel %vm692, %v918, 0
      %v940 = vsel %vm692, %v919, 0
      %v943 = vsel %vm699, %v935, 0
      %945 = vmatprep.subr.bf16.mxu0 0
      %946 = vmatpush1.bf16.msra.mxu0 %v943
      %947 = vmatprep.subr.bf16.mxu0 0
      %948 = vmatpush1.bf16.msra.mxu0 0
      %949 = vmatprep.subr.bf16.mxu0 0
      %950 = vmatpush1.bf16.msra.mxu0 0
      %951 = vmatprep.subr.bf16.mxu0 0
      %952 = vmatpush1.bf16.msra.mxu0 0
      %953 = vmatprep.subr.bf16.mxu0 0
      %954 = vmatpush1.bf16.msra.mxu0 0
      %955 = vmatprep.subr.bf16.mxu0 0
      %956 = vmatpush1.bf16.msra.mxu0 0
      %957 = vmatprep.subr.bf16.mxu0 0
      %958 = vmatpush1.bf16.msra.mxu0 0
      %959 = vmatprep.subr.bf16.mxu0 0
      %960 = vmatpush1.bf16.msra.mxu0 0
      %961 = vmatprep.subr.bf16.mxu0 0
      %962 = vmatpush1.bf16.msra.mxu0 0
      %963 = vmatprep.subr.bf16.mxu0 0
      %964 = vmatpush1.bf16.msra.mxu0 0
      %965 = vmatprep.subr.bf16.mxu0 0
      %966 = vmatpush1.bf16.msra.mxu0 0
      %967 = vmatprep.subr.bf16.mxu0 0
      %968 = vmatpush1.bf16.msra.mxu0 0
      %969 = vmatprep.subr.bf16.mxu0 0
      %970 = vmatpush1.bf16.msra.mxu0 0
      %971 = vmatprep.subr.bf16.mxu0 0
      %972 = vmatpush1.bf16.msra.mxu0 0
      %973 = vmatprep.subr.bf16.mxu0 0
      %974 = vmatpush1.bf16.msra.mxu0 0
      %975 = vmatprep.subr.bf16.mxu0 0
      %976 = vmatpush1.bf16.msra.mxu0 0
      %977 = vmatprep.mubr.bf16.mxu0 0
      %978 = vmatmul.mubr.bf16.gmra.mrb[0].mxu0 %v937
      %v979 = vpop.f32.mrb[0].mxu0
      %v980 = vpop.f32.mrb[0].mxu0
      %v981 = vpop.f32.mrb[0].mxu0
      %v982 = vadd.f32 %v929, %v981
      %v983 = vpop.f32.mrb[0].mxu0
      %984 = vmatprep.mubr.bf16.mxu0 0
      %985 = vmatmul.mubr.bf16.gmra.mrb[0].mxu0 %v940
      %v986 = vpop.f32.mrb[0].mxu0
      %v987 = vadd.f32 %v929, %v986
      %v988 = vpop.f32.mrb[0].mxu0
      %v989 = vpop.f32.mrb[0].mxu0
      %v990 = vpop.f32.mrb[0].mxu0
      %991 = vdwg.mxu0
      %v992 = vmul.f32 %v982, 0.5
      %v993 = vmul.f32 %v987, 0.5
      %v994 = vtanh.pop %v992
      %v995 = vtanh.pop %v993
      %v996 = vadd.f32 %v994, 1.0
      %v997 = vadd.f32 %v995, 1.0
      %v998 = vmul.f32 %v992, %v996
      %v999 = vmul.f32 %v993, %v997
      %v1000 = vadd.f32 %v769, %v998
      %v1001 = vadd.f32 %v770, %v999
      %v1002 = vpack.c.bf16 %v1001, %v1000
      %v1003 = vld [vmem:[%s3] sm:$0x3]
      %v1004 = vld [vmem:[%s4] sm:$0x3]
      %1006 = vrot.lane.b32.xlu0 %v528, 124
      %v1007 = vpop.permute.xlu0 %1006
      %v1009 = vsel %vm452, %v1007, 0
      %v1012 = vsel %vm459, %v1004, 0
      %1014 = vmatprep.subr.bf16.mxu0 0
      %1015 = vmatpush1.bf16.msra.mxu0 %v1012
      %1016 = vmatprep.subr.bf16.mxu0 0
      %1017 = vmatpush1.bf16.msra.mxu0 0
      %1018 = vmatprep.subr.bf16.mxu0 0
      %1019 = vmatpush1.bf16.msra.mxu0 0
      %1020 = vmatprep.subr.bf16.mxu0 0
      %1021 = vmatpush1.bf16.msra.mxu0 0
      %1022 = vmatprep.subr.bf16.mxu0 0
      %1023 = vmatpush1.bf16.msra.mxu0 0
      %1024 = vmatprep.subr.bf16.mxu0 0
      %1025 = vmatpush1.bf16.msra.mxu0 0
      %1026 = vmatprep.subr.bf16.mxu0 0
      %1027 = vmatpush1.bf16.msra.mxu0 0
      %1028 = vmatprep.subr.bf16.mxu0 0
      %1029 = vmatpush1.bf16.msra.mxu0 0
      %1030 = vmatprep.subr.bf16.mxu0 0
      %1031 = vmatpush1.bf16.msra.mxu0 0
      %1032 = vmatprep.subr.bf16.mxu0 0
      %1033 = vmatpush1.bf16.msra.mxu0 0
      %1034 = vmatprep.subr.bf16.mxu0 0
      %1035 = vmatpush1.bf16.msra.mxu0 0
      %1036 = vmatprep.subr.bf16.mxu0 0
      %1037 = vmatpush1.bf16.msra.mxu0 0
      %1038 = vmatprep.subr.bf16.mxu0 0
      %1039 = vmatpush1.bf16.msra.mxu0 0
      %1040 = vmatprep.subr.bf16.mxu0 0
      %1041 = vmatpush1.bf16.msra.mxu0 0
      %1042 = vmatprep.subr.bf16.mxu0 0
      %1043 = vmatpush1.bf16.msra.mxu0 0
      %1044 = vmatprep.subr.bf16.mxu0 0
      %1045 = vmatpush1.bf16.msra.mxu0 0
      %1046 = vmatprep.mubr.bf16.mxu0 0
      %1047 = vmatmul.mubr.bf16.gmra.mrb[0].mxu0 %v1009
      %v1048 = vpop.f32.mrb[0].mxu0
      %v1049 = vadd.f32 0.0, %v1048
      %v1050 = vpop.f32.mrb[0].mxu0
      %v1051 = vpop.f32.mrb[0].mxu0
      %v1052 = vadd.f32 0.0, %v1051
      %v1053 = vpop.f32.mrb[0].mxu0
      %1054 = vdwg.mxu0
      %v1056 = vsel %vm452, %v1002, 0
      %v1059 = vsel %vm459, %v1003, 0
      %1061 = vmatprep.subr.bf16.mxu0 0
      %1062 = vmatpush1.bf16.msra.mxu0 %v1059
      %1063 = vmatprep.subr.bf16.mxu0 0
      %1064 = vmatpush1.bf16.msra.mxu0 0
      %1065 = vmatprep.subr.bf16.mxu0 0
      %1066 = vmatpush1.bf16.msra.mxu0 0
      %1067 = vmatprep.subr.bf16.mxu0 0
      %1068 = vmatpush1.bf16.msra.mxu0 0
      %1069 = vmatprep.subr.bf16.mxu0 0
      %1070 = vmatpush1.bf16.msra.mxu0 0
      %1071 = vmatprep.subr.bf16.mxu0 0
      %1072 = vmatpush1.bf16.msra.mxu0 0
      %1073 = vmatprep.subr.bf16.mxu0 0
      %1074 = vmatpush1.bf16.msra.mxu0 0
      %1075 = vmatprep.subr.bf16.mxu0 0
      %1076 = vmatpush1.bf16.msra.mxu0 0
      %1077 = vmatprep.subr.bf16.mxu0 0
      %1078 = vmatpush1.bf16.msra.mxu0 0
      %1079 = vmatprep.subr.bf16.mxu0 0
      %1080 = vmatpush1.bf16.msra.mxu0 0
      %1081 = vmatprep.subr.bf16.mxu0 0
      %1082 = vmatpush1.bf16.msra.mxu0 0
      %1083 = vmatprep.subr.bf16.mxu0 0
      %1084 = vmatpush1.bf16.msra.mxu0 0
      %1085 = vmatprep.subr.bf16.mxu0 0
      %1086 = vmatpush1.bf16.msra.mxu0 0
      %1087 = vmatprep.subr.bf16.mxu0 0
      %1088 = vmatpush1.bf16.msra.mxu0 0
      %1089 = vmatprep.subr.bf16.mxu0 0
      %1090 = vmatpush1.bf16.msra.mxu0 0
      %1091 = vmatprep.subr.bf16.mxu0 0
      %1092 = vmatpush1.bf16.msra.mxu0 0
      %1093 = vmatprep.mubr.bf16.mxu0 0
      %1094 = vmatmul.mubr.bf16.gmra.mrb[0].mxu0 %v1056
      %v1095 = vpop.f32.mrb[0].mxu0
      %v1096 = vadd.f32 %v1049, %v1095
      %v1097 = vpop.f32.mrb[0].mxu0
      %v1098 = vpop.f32.mrb[0].mxu0
      %v1099 = vadd.f32 %v1052, %v1098
      %v1100 = vpop.f32.mrb[0].mxu0
      %1101 = vdwg.mxu0
      %v1102 = vld [vmem:[%s5] sm:$0x1]
      %v1104 = vlaneseq
      %v1105 = vshrl.u32 %v1104, 7
      %v1106 = vsub.s32 0, %v1105
      %v1107 = vrot.slane %v1102, %v1106
      %v1109 = vadd.f32 %v1096, %v1107
      %v1110 = vadd.f32 %v1099, %v1107
      %v1111 = vmul.f32 %v1109, 0.5
      %v1112 = vmul.f32 %v1110, 0.5
      %v1113 = vtanh.pop %v1111
      %v1114 = vtanh.pop %v1112
      %v1115 = vadd.f32 %v1113, 1.0
      %v1116 = vadd.f32 %v1114, 1.0
      %v1117 = vmul.f32 %v1111, %v1115
      %v1118 = vmul.f32 %v1112, %v1116
      %1119 = vst.msk [vmem:[%s395] sm:$0xff] %vm671, %v1117
      %1120 = vst.msk [vmem:[%s395 + $0x8] sm:$0xff] %vm671, %v1118
      %s1121 = smul.u32 2, %s26
      %p1122 = scmp.lt.s32.totalorder %s25, 1
      %s1123 = scalar_select %p1122, %s25, 1
      %p1124 = scmp.lt.s32.totalorder %s1121, 1
      %s1125 = scalar_select %p1124, %s1121, 1
      %s1126 = smul.addr %s1123, 2
      %s1127 = sadd.s32 %s1125, %s1126
      %s1128 = smul.addr %s1127, 8
      %s1129 = scalar_lea.vmem %s10, %s1128
      // Predicated region
      $region61: #{tpu_custom_call.1} parent=59 // pred_check
        %p1130 = pneg %p270
      $region62: #{tpu_custom_call.1} parent=59 // pred_check_branch
        %1132 = sbr.rel (%p1130) target = $region64
      $region63: #{tpu_custom_call.1} parent=59 // pred_region
        %s1133 = smul.u32 2, %s26
      $region64: #{tpu_custom_call.1} parent=59 // pred_fallthru
        _
    $region60: #{tpu_custom_call.1} parent=5 // pred_fallthru
      _
    %p1134 = scmp.le.s32.totalorder 2, %s16
    // Predicated region
    $region65: #{tpu_custom_call.1} parent=5 // pred_check
      %p1135 = pneg %p1134
    $region66: #{tpu_custom_call.1} parent=5 // pred_check_branch
      %1137 = sbr.rel (%p1135) target = $region68
    $region67: #{tpu_custom_call.1} parent=5 // pred_region
      %s1138 = ssub.s32 %s16, 2
      // Predicated region
      $region69: #{tpu_custom_call.1} parent=67 // pred_check
        %p1139 = pneg %p276
      $region70: #{tpu_custom_call.1} parent=67 // pred_check_branch
        %1141 = sbr.rel (%p1139) target = $region72
      $region71: #{tpu_custom_call.1} parent=67 // pred_region
        %s1142 = smul.u32 2, %s28
        %p1143 = scmp.lt.s32.totalorder %s27, 1
        %s1144 = scalar_select %p1143, %s27, 1
        %p1145 = scmp.lt.s32.totalorder %s1142, 1
        %s1146 = scalar_select %p1145, %s1142, 1
        %s1147 = smul.addr %s1144, 2
        %s1148 = sadd.s32 %s1146, %s1147
        %s1149 = smul.addr %s1148, 8
        %s1150 = scalar_lea.vmem %s10, %s1149
      $region72: #{tpu_custom_call.1} parent=67 // pred_fallthru
        _
    $region68: #{tpu_custom_call.1} parent=5 // pred_fallthru
      _
  $region6: #{tpu_custom_call.1} parent=0 // loop_footer
    %s20 = sadd.s32 1, %s16
  $region7: #{tpu_custom_call.1} parent=0 // loop_footer_branch
    %15 = sbr.rel target = $region3
  $region8: #{tpu_custom_call.1} parent=0 // loop_exit
    _

</llo_original>
